<compile_context>
chip_gen: v7x
topology: tpu7x:2x2x1
jax: 0.10.0
libtpu: 0.0.40
codegen_flags: <defaults>
</compile_context>

<pallas_src>
import jax
import jax.numpy as jnp
from jax.experimental import pallas as pl
from jax.experimental.pallas import tpu as pltpu

EPS = 1e-5  # torch.nn.LayerNorm default eps


# ----------------------------- kernels -------------------------------------


def _make_resident_kernel(mxu_dtype):
    """W fully resident in VMEM: one matmul + LayerNorm per row tile."""

    def kernel(x_ref, w_ref, b_ref, gamma_ref, beta_ref, o_ref):
        xt = x_ref[...]
        wt = w_ref[...]
        if mxu_dtype is not None:
            xt = xt.astype(mxu_dtype)
            wt = wt.astype(mxu_dtype)
        # fn(x) = Linear(dim, dim): MXU matmul, f32 accumulation.
        y = jnp.dot(xt, wt, preferred_element_type=jnp.float32)
        y = y + b_ref[...].astype(jnp.float32)

        # LayerNorm over the last (lane) dim — biased variance, f32 math.
        mean = jnp.mean(y, axis=-1, keepdims=True)
        cent = y - mean
        var = jnp.mean(cent * cent, axis=-1, keepdims=True)
        y_hat = cent * jax.lax.rsqrt(var + EPS)

        o_ref[...] = (y_hat * gamma_ref[...].astype(jnp.float32)
                      + beta_ref[...].astype(jnp.float32)).astype(o_ref.dtype)

    return kernel


def _make_ktiled_kernel(mxu_dtype):
    """W streamed over a K grid axis; f32 accumulator, finalize on last k."""

    def kernel(x_ref, w_ref, b_ref, gamma_ref, beta_ref, o_ref, acc_ref):
        k = pl.program_id(1)

        @pl.when(k == 0)
        def _():
            acc_ref[...] = jnp.zeros_like(acc_ref)

        xt = x_ref[...]
        wt = w_ref[...]
        if mxu_dtype is not None:
            xt = xt.astype(mxu_dtype)
            wt = wt.astype(mxu_dtype)
        acc_ref[...] += jnp.dot(xt, wt, preferred_element_type=jnp.float32)

        @pl.when(k == pl.num_programs(1) - 1)
        def _():
            y = acc_ref[...] + b_ref[...].astype(jnp.float32)
            mean = jnp.mean(y, axis=-1, keepdims=True)
            cent = y - mean
            var = jnp.mean(cent * cent, axis=-1, keepdims=True)
            y_hat = cent * jax.lax.rsqrt(var + EPS)
            o_ref[...] = (y_hat * gamma_ref[...].astype(jnp.float32)
                          + beta_ref[...].astype(jnp.float32)).astype(o_ref.dtype)

    return kernel


# ----------------------------- sizing helpers -------------------------------


def _round_up(n, m):
    return ((n + m - 1) // m) * m


def _vmem_budget():
    """Generation-aware scoped-VMEM limit and a sizing budget with headroom."""
    try:
        cap = int(pltpu.get_tpu_info().vmem_capacity_bytes)
    except Exception:
        cap = 64 * 1024 * 1024  # conservative fallback: v7x has 64 MiB per TC
    if cap >= 128 * 1024 * 1024:      # v5e / v6e
        limit = 100 * 1024 * 1024
    else:                             # v7x
        limit = 48 * 1024 * 1024
    budget = limit - 6 * 1024 * 1024  # headroom for compiler-internal scratch
    return budget, limit


def _res_tile_bytes(br, dim, x_isz, o_isz):
    io_tiles = 2 * br * dim * (x_isz + o_isz)  # x + out tiles, double-buffered
    f32_work = 4 * br * dim * 4                # y, cent, y_hat, scaled result
    return io_tiles + f32_work


def _ktile_bytes(br, tk, dim, x_isz, w_isz, o_isz):
    x_tiles = 2 * br * tk * x_isz
    w_tiles = 2 * tk * dim * w_isz
    o_tiles = 2 * br * dim * o_isz
    acc = br * dim * 4
    f32_work = 3 * br * dim * 4
    return x_tiles + w_tiles + o_tiles + acc + f32_work


def _pick_row_tile(block_rows, rows, fits):
    br = _round_up(min(block_rows, _round_up(rows, 8)), 8)
    while br > 8 and not fits(br):
        br = max(8, _round_up(br // 2, 8))
    return br


# ----------------------------- wrapper --------------------------------------


def after_norm(x, w, b, gamma, beta, *, block_rows=1024, mxu_dtype=None,
               force_k_tiling=False, k_tile=None):
    """AfterNorm forward with fn = Linear(dim, dim): LayerNorm(x @ W + b)."""
    batch, seq, dim = x.shape
    assert dim % 128 == 0, (
        "dim must be a multiple of 128 for lane-dense stores; pad upstream")

    rows = batch * seq
    xf = x.reshape(rows, dim)          # metadata-only reshape, no copy

    if mxu_dtype is not None:
        # One-time wrapper cast: halves W DMA bytes + VMEM residency for bf16.
        w = w.astype(mxu_dtype)

    x_isz = jnp.dtype(x.dtype).itemsize
    w_isz = jnp.dtype(w.dtype).itemsize
    o_isz = x_isz
    w_bytes = dim * dim * w_isz
    const_bytes = 3 * dim * 4          # bias / gamma / beta (tiny)

    budget, vmem_limit = _vmem_budget()

    b2 = b.reshape(1, dim)
    g2 = gamma.reshape(1, dim)
    be2 = beta.reshape(1, dim)

    resident_ok = (not force_k_tiling and
                   w_bytes + _res_tile_bytes(64, dim, x_isz, o_isz) + const_bytes
                   <= budget)

    if resident_ok:
        br = _pick_row_tile(
            block_rows, rows,
            lambda r: w_bytes + _res_tile_bytes(r, dim, x_isz, o_isz)
            + const_bytes <= budget)

        out = pl.pallas_call(
            _make_resident_kernel(mxu_dtype),
            out_shape=jax.ShapeDtypeStruct((rows, dim), x.dtype),
            grid=(pl.cdiv(rows, br),),
            in_specs=[
                pl.BlockSpec((br, dim), lambda i: (i, 0)),          # x tile
                pl.BlockSpec((dim, dim), lambda i: (0, 0),          # W resident
                             pipeline_mode=pl.Buffered(1)),
                pl.BlockSpec((1, dim), lambda i: (0, 0),            # bias
                             pipeline_mode=pl.Buffered(1)),
                pl.BlockSpec((1, dim), lambda i: (0, 0),            # gamma
                             pipeline_mode=pl.Buffered(1)),
                pl.BlockSpec((1, dim), lambda i: (0, 0),            # beta
                             pipeline_mode=pl.Buffered(1)),
            ],
            out_specs=pl.BlockSpec((br, dim), lambda i: (i, 0)),
            compiler_params=pltpu.CompilerParams(
                dimension_semantics=("parallel",),   # rows shard across v7x TCs
                vmem_limit_bytes=vmem_limit,
            ),
        )(xf, w, b2, g2, be2)
    else:
        # K-tiled weight path: stream W in (tk, dim) blocks, accumulate in f32.
        if k_tile is not None:
            assert k_tile % 128 == 0 and dim % k_tile == 0
            tk = k_tile
        else:
            tk = 128
            for t in range(256, dim + 1, 128):
                if dim % t == 0 and 2 * t * dim * w_isz <= budget // 3:
                    tk = t

        br = _pick_row_tile(
            block_rows, rows,
            lambda r: _ktile_bytes(r, tk, dim, x_isz, w_isz, o_isz)
            + const_bytes <= budget)

        out = pl.pallas_call(
            _make_ktiled_kernel(mxu_dtype),
            out_shape=jax.ShapeDtypeStruct((rows, dim), x.dtype),
            grid=(pl.cdiv(rows, br), dim // tk),
            in_specs=[
                pl.BlockSpec((br, tk), lambda i, k: (i, k)),        # x tile
                pl.BlockSpec((tk, dim), lambda i, k: (k, 0)),       # W stripe
                pl.BlockSpec((1, dim), lambda i, k: (0, 0),
                             pipeline_mode=pl.Buffered(1)),
                pl.BlockSpec((1, dim), lambda i, k: (0, 0),
                             pipeline_mode=pl.Buffered(1)),
                pl.BlockSpec((1, dim), lambda i, k: (0, 0),
                             pipeline_mode=pl.Buffered(1)),
            ],
            out_specs=pl.BlockSpec((br, dim), lambda i, k: (i, 0)),
            scratch_shapes=[pltpu.VMEM((br, dim), jnp.float32)],
            compiler_params=pltpu.CompilerParams(
                dimension_semantics=("parallel", "arbitrary"),
                vmem_limit_bytes=vmem_limit,
            ),
        )(xf, w, b2, g2, be2)

    return out.reshape(batch, seq, dim)


# ----------------------------- reference ------------------------------------


def reference(x, w, b, gamma, beta):
    y = jnp.einsum("bsd,de->bse", x.astype(jnp.float32), w.astype(jnp.float32)) + b
    mean = jnp.mean(y, axis=-1, keepdims=True)
    var = jnp.mean((y - mean) ** 2, axis=-1, keepdims=True)
    return ((y - mean) * jax.lax.rsqrt(var + EPS)) * gamma + beta


if __name__ == "__main__":
    key = jax.random.PRNGKey(0)

    def make_inputs(batch, seq, dim, dtype=jnp.float32):
        kx, kw, kb = jax.random.split(key, 3)
        x = jax.random.normal(kx, (batch, seq, dim), dtype=dtype)
        # fn = Linear(dim, dim): deterministic init
        w = jax.random.normal(kw, (dim, dim), dtype=dtype) * (1.0 / dim**0.5)
        b = jax.random.normal(kb, (dim,), dtype=dtype) * 0.01
        # LayerNorm default init: weight=1, bias=0
        gamma = jnp.ones((dim,), dtype=dtype)
        beta = jnp.zeros((dim,), dtype=dtype)
        return x, w, b, gamma, beta

    # 1) Resident-W path, native f32 MXU (exact vs reference).
    x, w, b, gamma, beta = make_inputs(batch=2, seq=8, dim=128)
    out = jax.block_until_ready(after_norm(x, w, b, gamma, beta))
    ref = reference(x, w, b, gamma, beta)
    assert out.shape == (2, 8, 128)
    assert jnp.allclose(out, ref.astype(out.dtype), atol=1e-4, rtol=1e-4)

    # 2) K-tiled weight path (streamed W + f32 accumulator), forced at small dim.
    x2, w2, b2, g2, be2 = make_inputs(batch=2, seq=8, dim=256)
    out2 = jax.block_until_ready(
        after_norm(x2, w2, b2, g2, be2, force_k_tiling=True, k_tile=128))
    ref2 = reference(x2, w2, b2, g2, be2)
    assert jnp.allclose(out2, ref2.astype(out2.dtype), atol=1e-4, rtol=1e-4)

    # 3) bf16 MXU path (f32 accumulation / f32 LayerNorm math), loose tolerance.
    out3 = jax.block_until_ready(
        after_norm(x, w, b, gamma, beta, mxu_dtype=jnp.bfloat16))
    assert jnp.allclose(out3, ref.astype(out3.dtype), atol=1e-1, rtol=1e-1)

    print("KERNEL_OK")
</pallas_src>

<mosaic_0001>
module attributes {stable_mosaic.version = 11 : i64} {
  func.func @kernel(%arg0: i32, %arg1: memref<16x128xf32, #tpu.memory_space<vmem>>, %arg2: memref<128x128xf32, #tpu.memory_space<vmem>>, %arg3: memref<1x128xf32, #tpu.memory_space<vmem>>, %arg4: memref<1x128xf32, #tpu.memory_space<vmem>>, %arg5: memref<1x128xf32, #tpu.memory_space<vmem>>, %arg6: memref<16x128xf32, #tpu.memory_space<vmem>>) attributes {dimension_semantics = [#tpu.dimension_semantics<parallel>], iteration_bounds = array<i64: 1>, scalar_prefetch = 0 : i64, scratch_operands = 0 : i64, tpu.core_type = #tpu.core_type<tc>, window_params = [{transform_indices = @transform_0, window_bounds = array<i64: 16, 128>}, {pipeline_mode = #tpu.pipeline_mode<synchronous>, transform_indices = @transform_1, window_bounds = array<i64: 128, 128>}, {pipeline_mode = #tpu.pipeline_mode<synchronous>, transform_indices = @transform_2, window_bounds = array<i64: 1, 128>}, {pipeline_mode = #tpu.pipeline_mode<synchronous>, transform_indices = @transform_3, window_bounds = array<i64: 1, 128>}, {pipeline_mode = #tpu.pipeline_mode<synchronous>, transform_indices = @transform_4, window_bounds = array<i64: 1, 128>}, {transform_indices = @transform_5, window_bounds = array<i64: 16, 128>}]} {
    %c0 = arith.constant 0 : index
    %c0_0 = arith.constant 0 : index
    %0 = vector.load %arg1[%c0, %c0_0] : memref<16x128xf32, #tpu.memory_space<vmem>>, vector<16x128xf32>
    %c0_1 = arith.constant 0 : index
    %c0_2 = arith.constant 0 : index
    %1 = vector.load %arg2[%c0_1, %c0_2] : memref<128x128xf32, #tpu.memory_space<vmem>>, vector<128x128xf32>
    %cst = arith.constant dense<0.000000e+00> : vector<16x128xf32>
    %2 = tpu.matmul %0, %1, %cst {dimension_numbers = #tpu.dot_dimension_numbers<[1], [0], [0], [1], [0, 0, 1, 1], [], []>} : vector<16x128xf32>, vector<128x128xf32>, vector<16x128xf32> -> vector<16x128xf32>
    %c0_3 = arith.constant 0 : index
    %c0_4 = arith.constant 0 : index
    %3 = vector.load %arg3[%c0_3, %c0_4] : memref<1x128xf32, #tpu.memory_space<vmem>>, vector<1x128xf32>
    %4 = vector.broadcast %3 : vector<1x128xf32> to vector<16x128xf32>
    %5 = arith.addf %2, %4 : vector<16x128xf32>
    %cst_5 = arith.constant dense<0.000000e+00> : vector<16xf32>
    %6 = vector.multi_reduction <add>, %5, %cst_5 [1] : vector<16x128xf32> to vector<16xf32>
    %7 = vector.shape_cast %6 : vector<16xf32> to vector<16x1xf32>
    %cst_6 = arith.constant 1.280000e+02 : f32
    %8 = vector.broadcast %cst_6 : f32 to vector<16x1xf32>
    %9 = arith.divf %7, %8 : vector<16x1xf32>
    %10 = vector.broadcast %9 : vector<16x1xf32> to vector<16x128xf32>
    %11 = arith.subf %5, %10 : vector<16x128xf32>
    %12 = arith.mulf %11, %11 : vector<16x128xf32>
    %cst_7 = arith.constant dense<0.000000e+00> : vector<16xf32>
    %13 = vector.multi_reduction <add>, %12, %cst_7 [1] : vector<16x128xf32> to vector<16xf32>
    %14 = vector.shape_cast %13 : vector<16xf32> to vector<16x1xf32>
    %cst_8 = arith.constant 1.280000e+02 : f32
    %15 = vector.broadcast %cst_8 : f32 to vector<16x1xf32>
    %16 = arith.divf %14, %15 : vector<16x1xf32>
    %cst_9 = arith.constant 9.99999974E-6 : f32
    %17 = vector.broadcast %cst_9 : f32 to vector<16x1xf32>
    %18 = arith.addf %16, %17 : vector<16x1xf32>
    %19 = math.rsqrt %18 : vector<16x1xf32>
    %20 = vector.broadcast %19 : vector<16x1xf32> to vector<16x128xf32>
    %21 = arith.mulf %11, %20 : vector<16x128xf32>
    %c0_10 = arith.constant 0 : index
    %c0_11 = arith.constant 0 : index
    %22 = vector.load %arg4[%c0_10, %c0_11] : memref<1x128xf32, #tpu.memory_space<vmem>>, vector<1x128xf32>
    %23 = vector.broadcast %22 : vector<1x128xf32> to vector<16x128xf32>
    %24 = arith.mulf %21, %23 : vector<16x128xf32>
    %c0_12 = arith.constant 0 : index
    %c0_13 = arith.constant 0 : index
    %25 = vector.load %arg5[%c0_12, %c0_13] : memref<1x128xf32, #tpu.memory_space<vmem>>, vector<1x128xf32>
    %26 = vector.broadcast %25 : vector<1x128xf32> to vector<16x128xf32>
    %27 = arith.addf %24, %26 : vector<16x128xf32>
    %c0_14 = arith.constant 0 : index
    %c0_15 = arith.constant 0 : index
    %28 = vector.load %arg6[%c0_14, %c0_15] : memref<16x128xf32, #tpu.memory_space<vmem>>, vector<16x128xf32>
    tpu.vector_store %arg6[%c0_14, %c0_15], %27 {strides = array<i32>} : memref<16x128xf32, #tpu.memory_space<vmem>>, vector<16x128xf32>,
    return
  }
  func.func @transform_0(%arg0: i32) -> (i32, i32) {
    %c0_i32 = arith.constant 0 : i32
    %c0_i32_0 = arith.constant 0 : i32
    return %arg0, %c0_i32 : i32, i32
  }
  func.func @transform_1(%arg0: i32) -> (i32, i32) {
    %c0_i32 = arith.constant 0 : i32
    %c0_i32_0 = arith.constant 0 : i32
    %c0_i32_1 = arith.constant 0 : i32
    return %c0_i32, %c0_i32_0 : i32, i32
  }
  func.func @transform_2(%arg0: i32) -> (i32, i32) {
    %c0_i32 = arith.constant 0 : i32
    %c0_i32_0 = arith.constant 0 : i32
    %c0_i32_1 = arith.constant 0 : i32
    return %c0_i32, %c0_i32_0 : i32, i32
  }
  func.func @transform_3(%arg0: i32) -> (i32, i32) {
    %c0_i32 = arith.constant 0 : i32
    %c0_i32_0 = arith.constant 0 : i32
    %c0_i32_1 = arith.constant 0 : i32
    return %c0_i32, %c0_i32_0 : i32, i32
  }
  func.func @transform_4(%arg0: i32) -> (i32, i32) {
    %c0_i32 = arith.constant 0 : i32
    %c0_i32_0 = arith.constant 0 : i32
    %c0_i32_1 = arith.constant 0 : i32
    return %c0_i32, %c0_i32_0 : i32, i32
  }
  func.func @transform_5(%arg0: i32) -> (i32, i32) {
    %c0_i32 = arith.constant 0 : i32
    %c0_i32_0 = arith.constant 0 : i32
    return %arg0, %c0_i32 : i32, i32
  }
}

</mosaic_0001>

<llo_original>
// kernel: tpu_custom_call.1
$region0: #{tpu_custom_call.1}
  #allocation0 [shape = 'u32[]', space=smem, size = 0x4, offset = 0x4, fixed_abs, tag = 'smem constant byte address 0x4 - core index']
  #allocation1 [shape = 'u32[144,128]{1,0:T(1,128)}', space=vmem, size = 0x12000, scoped, tag = 'internal scratch']
  %s0 = inlined_call_operand.hbm [shape: f32[16,128], index: 0, kind: input, shape index: {}]
  %s1 = inlined_call_operand.hbm [shape: f32[128,128], index: 1, kind: input, shape index: {}]
  %s2 = inlined_call_operand.vmem [shape: f32[1,128], index: 2, kind: input, shape index: {}]
  %s3 = inlined_call_operand.vmem [shape: f32[1,128], index: 3, kind: input, shape index: {}]
  %s4 = inlined_call_operand.vmem [shape: f32[1,128], index: 4, kind: input, shape index: {}]
  %s5 = inlined_call_operand.hbm [shape: f32[16,128], index: 5, kind: output, shape index: {}]
  %s6 = sld [smem:[#allocation0]]
  $region38: #{tpu_custom_call.1} parent=0
    _
  %s8 = ssub.s32 1, %s6
  %s9 = scalar_select 0, %s8, %s6
  $region1: #{tpu_custom_call.1} parent=0
    #allocation2 [shape = 'u8[8192]{0}', space=vmem, size = 0x2000, scoped, tag = 'input window, operand 0, single buffered']
    #allocation3 [shape = 's32[1]{0}', space=sflag, size = 0x4, scoped, tag = 'scoped memory for tpu_custom_call.1']
    #allocation4 [shape = 's32[1]{0}', space=sflag, size = 0x4, scoped, tag = 'scoped memory for tpu_custom_call.1']
    #allocation5 [shape = 'u8[65536]{0}', space=vmem, size = 0x10000, scoped, tag = 'input window, operand 1, single buffered']
    #allocation6 [shape = 's32[1]{0}', space=sflag, size = 0x4, scoped, tag = 'scoped memory for tpu_custom_call.1']
    #allocation7 [shape = 'u8[8192]{0}', space=vmem, size = 0x2000, scoped, tag = 'output window, operand 0, single buffered']
    %10 = vsyncpa [#allocation3], 0
    %11 = vsyncpa [#allocation6], 0
    %12 = vsyncpa [#allocation4], 0
    // Predicated region
    $region2: #{tpu_custom_call.1} parent=1 // pred_check
      _
    $region3: #{tpu_custom_call.1} parent=1 // pred_check_branch
      %14 = sbr.rel (0) target = $region5
    $region4: #{tpu_custom_call.1} parent=1 // pred_region
      %s16 = ssub.s32 256, 256
      %17 = vsyncadd [#allocation3], %s16
      %s18 = sshll.u32 [#allocation2], 4
      %s19 = int_to_ptr.vmem [resolvable:$true] %s18
      %24 = dma.hbm_to_vmem [thread:$0]  %s0, 256, %s19, [#allocation3], 128, 128, 8
    $region5: #{tpu_custom_call.1} parent=1 // pred_fallthru
      _
    // Predicated region
    $region6: #{tpu_custom_call.1} parent=1 // pred_check
      _
    $region7: #{tpu_custom_call.1} parent=1 // pred_check_branch
      %26 = sbr.rel (0) target = $region9
    $region8: #{tpu_custom_call.1} parent=1 // pred_region
      %s28 = ssub.s32 2048, 2048
      %29 = vsyncadd [#allocation6], %s28
      %s30 = sshll.u32 [#allocation5], 4
      %s31 = int_to_ptr.vmem [resolvable:$true] %s30
      %36 = dma.hbm_to_vmem [thread:$0]  %s1, 2048, %s31, [#allocation6], 128, 128, 8
    $region9: #{tpu_custom_call.1} parent=1 // pred_fallthru
      _
    // Predicated region
    $region10: #{tpu_custom_call.1} parent=1 // pred_check
      _
    $region11: #{tpu_custom_call.1} parent=1 // pred_check_branch
      %38 = sbr.rel (0) target = $region13
    $region12: #{tpu_custom_call.1} parent=1 // pred_region
      _
    $region13: #{tpu_custom_call.1} parent=1 // pred_fallthru
      _
    // Predicated region
    $region14: #{tpu_custom_call.1} parent=1 // pred_check
      _
    $region15: #{tpu_custom_call.1} parent=1 // pred_check_branch
      %40 = sbr.rel (0) target = $region17
    $region16: #{tpu_custom_call.1} parent=1 // pred_region
      _
    $region17: #{tpu_custom_call.1} parent=1 // pred_fallthru
      _
    // Predicated region
    $region18: #{tpu_custom_call.1} parent=1 // pred_check
      _
    $region19: #{tpu_custom_call.1} parent=1 // pred_check_branch
      %42 = sbr.rel (0) target = $region21
    $region20: #{tpu_custom_call.1} parent=1 // pred_region
      _
    $region21: #{tpu_custom_call.1} parent=1 // pred_fallthru
      _
    // Predicated region
    $region22: #{tpu_custom_call.1} parent=1 // pred_check
      _
    $region23: #{tpu_custom_call.1} parent=1 // pred_check_branch
      %44 = sbr.rel (0) target = $region25
    $region24: #{tpu_custom_call.1} parent=1 // pred_region
      %45 = dma.done [#allocation3], 256
    $region25: #{tpu_custom_call.1} parent=1 // pred_fallthru
      _
    // Predicated region
    $region26: #{tpu_custom_call.1} parent=1 // pred_check
      _
    $region27: #{tpu_custom_call.1} parent=1 // pred_check_branch
      %47 = sbr.rel (0) target = $region29
    $region28: #{tpu_custom_call.1} parent=1 // pred_region
      %48 = dma.done [#allocation6], 2048
    $region29: #{tpu_custom_call.1} parent=1 // pred_fallthru
      _
    %v49 = vld [vmem:[#allocation2] sm:$0xff]
    %v50 = vld [vmem:[#allocation2 + $0x8] sm:$0xff]
    %v51 = vld [vmem:[#allocation5] sm:$0xff]
    %v52 = vld [vmem:[#allocation5 + $0x8] sm:$0xff]
    %v53 = vld [vmem:[#allocation5 + $0x10] sm:$0xff]
    %v54 = vld [vmem:[#allocation5 + $0x18] sm:$0xff]
    %v55 = vld [vmem:[#allocation5 + $0x20] sm:$0xff]
    %v56 = vld [vmem:[#allocation5 + $0x28] sm:$0xff]
    %v57 = vld [vmem:[#allocation5 + $0x30] sm:$0xff]
    %v58 = vld [vmem:[#allocation5 + $0x38] sm:$0xff]
    %v59 = vld [vmem:[#allocation5 + $0x40] sm:$0xff]
    %v60 = vld [vmem:[#allocation5 + $0x48] sm:$0xff]
    %v61 = vld [vmem:[#allocation5 + $0x50] sm:$0xff]
    %v62 = vld [vmem:[#allocation5 + $0x58] sm:$0xff]
    %v63 = vld [vmem:[#allocation5 + $0x60] sm:$0xff]
    %v64 = vld [vmem:[#allocation5 + $0x68] sm:$0xff]
    %v65 = vld [vmem:[#allocation5 + $0x70] sm:$0xff]
    %v66 = vld [vmem:[#allocation5 + $0x78] sm:$0xff]
    %v67 = vld [vmem:[%s2] sm:$0x1]
    %v69 = vlaneseq
    %v70 = vshrl.u32 %v69, 7
    %v71 = vsub.s32 0, %v70
    %v72 = vrot.slane %v67, %v71
    %74 = vmatprep.subr.mxu0 0.0
    %75 = vmatpush1.msra.mxu0 %v51
    %76 = vmatprep.subr.mxu0 0.0
    %77 = vmatpush1.msra.mxu0 %v52
    %78 = vmatprep.subr.mxu0 0.0
    %79 = vmatpush1.msra.mxu0 %v53
    %80 = vmatprep.subr.mxu0 0.0
    %81 = vmatpush1.msra.mxu0 %v54
    %82 = vmatprep.subr.mxu0 0.0
    %83 = vmatpush1.msra.mxu0 %v55
    %84 = vmatprep.subr.mxu0 0.0
    %85 = vmatpush1.msra.mxu0 %v56
    %86 = vmatprep.subr.mxu0 0.0
    %87 = vmatpush1.msra.mxu0 %v57
    %88 = vmatprep.subr.mxu0 0.0
    %89 = vmatpush1.msra.mxu0 %v58
    %90 = vmatprep.subr.mxu0 0.0
    %91 = vmatpush1.msra.mxu0 %v59
    %92 = vmatprep.subr.mxu0 0.0
    %93 = vmatpush1.msra.mxu0 %v60
    %94 = vmatprep.subr.mxu0 0.0
    %95 = vmatpush1.msra.mxu0 %v61
    %96 = vmatprep.subr.mxu0 0.0
    %97 = vmatpush1.msra.mxu0 %v62
    %98 = vmatprep.subr.mxu0 0.0
    %99 = vmatpush1.msra.mxu0 %v63
    %100 = vmatprep.subr.mxu0 0.0
    %101 = vmatpush1.msra.mxu0 %v64
    %102 = vmatprep.subr.mxu0 0.0
    %103 = vmatpush1.msra.mxu0 %v65
    %104 = vmatprep.subr.mxu0 0.0
    %105 = vmatpush1.msra.mxu0 %v66
    %106 = vmatprep.subr.mxu0 0.0
    %107 = vmatpush1.msra.mxu0 0.0
    %108 = vmatprep.subr.mxu0 0.0
    %109 = vmatpush1.msra.mxu0 0.0
    %110 = vmatprep.subr.mxu0 0.0
    %111 = vmatpush1.msra.mxu0 0.0
    %112 = vmatprep.subr.mxu0 0.0
    %113 = vmatpush1.msra.mxu0 0.0
    %114 = vmatprep.subr.mxu0 0.0
    %115 = vmatpush1.msra.mxu0 0.0
    %116 = vmatprep.subr.mxu0 0.0
    %117 = vmatpush1.msra.mxu0 0.0
    %118 = vmatprep.subr.mxu0 0.0
    %119 = vmatpush1.msra.mxu0 0.0
    %120 = vmatprep.subr.mxu0 0.0
    %121 = vmatpush1.msra.mxu0 0.0
    %122 = vmatprep.subr.mxu0 0.0
    %123 = vmatpush1.msra.mxu0 0.0
    %124 = vmatprep.subr.mxu0 0.0
    %125 = vmatpush1.msra.mxu0 0.0
    %126 = vmatprep.subr.mxu0 0.0
    %127 = vmatpush1.msra.mxu0 0.0
    %128 = vmatprep.subr.mxu0 0.0
    %129 = vmatpush1.msra.mxu0 0.0
    %130 = vmatprep.subr.mxu0 0.0
    %131 = vmatpush1.msra.mxu0 0.0
    %132 = vmatprep.subr.mxu0 0.0
    %133 = vmatpush1.msra.mxu0 0.0
    %134 = vmatprep.subr.mxu0 0.0
    %135 = vmatpush1.msra.mxu0 0.0
    %136 = vmatprep.subr.mxu0 0.0
    %137 = vmatpush1.msra.mxu0 0.0
    %138 = vmatprep.mubr.f32.mxu0 0.0
    %139 = vmatmul.mubr.f32.gmra.mrb[0].mxu0 %v49
    %v140 = vpop.f32.mrb[0].mxu0
    %v141 = vadd.f32 %v72, %v140
    %v142 = vpop.f32.mrb[0].mxu0
    %143 = vmatprep.mubr.f32.mxu0 0.0
    %144 = vmatmul.mubr.f32.gmra.mrb[0].mxu0 %v50
    %v145 = vpop.f32.mrb[0].mxu0
    %v146 = vadd.f32 %v72, %v145
    %v147 = vpop.f32.mrb[0].mxu0
    %148 = vdwg.mxu0
    %149 = vadd.xlane.f32.xlu0 %v141
    %v150 = vpop.xlane.xlu0 %149
    %151 = vadd.xlane.f32.xlu0 %v146
    %v152 = vpop.xlane.xlu0 %151
    %v153 = vrcp.pop 128.0
    %v154 = vmul.f32 %v150, %v153
    %v155 = vmul.f32 %v152, %v153
    %v156 = vsub.f32 %v141, %v154
    %v157 = vsub.f32 %v146, %v155
    %v158 = vmul.f32 %v156, %v156
    %v159 = vmul.f32 %v157, %v157
    %160 = vadd.xlane.f32.xlu0 %v158
    %v161 = vpop.xlane.xlu0 %160
    %162 = vadd.xlane.f32.xlu0 %v159
    %v163 = vpop.xlane.xlu0 %162
    %v164 = vmul.f32 %v161, %v153
    %v165 = vmul.f32 %v163, %v153
    %v166 = vadd.f32 %v164, 1e-05
    %v167 = vadd.f32 %v165, 1e-05
    %v168 = vrsqrt.pop %v166
    %v169 = vrsqrt.pop %v167
    %v170 = vmul.f32 %v156, %v168
    %v171 = vmul.f32 %v157, %v169
    %v172 = vld [vmem:[%s3] sm:$0x1]
    %v174 = vlaneseq
    %v175 = vshrl.u32 %v174, 7
    %v176 = vsub.s32 0, %v175
    %v177 = vrot.slane %v172, %v176
    %v179 = vmul.f32 %v170, %v177
    %v180 = vmul.f32 %v171, %v177
    %v181 = vld [vmem:[%s4] sm:$0x1]
    %v183 = vlaneseq
    %v184 = vshrl.u32 %v183, 7
    %v185 = vsub.s32 0, %v184
    %v186 = vrot.slane %v181, %v185
    %v188 = vadd.f32 %v179, %v186
    %v189 = vadd.f32 %v180, %v186
    %190 = vst [vmem:[#allocation7] sm:$0xff] %v188
    %191 = vst [vmem:[#allocation7 + $0x8] sm:$0xff] %v189
    // Predicated region
    $region30: #{tpu_custom_call.1} parent=1 // pred_check
      _
    $region31: #{tpu_custom_call.1} parent=1 // pred_check_branch
      %193 = sbr.rel (0) target = $region33
    $region32: #{tpu_custom_call.1} parent=1 // pred_region
      %s195 = ssub.s32 256, 256
      %196 = vsyncadd [#allocation4], %s195
      %s197 = sshll.u32 [#allocation7], 4
      %s198 = int_to_ptr.vmem [resolvable:$true] %s197
      %203 = dma.vmem_to_hbm [thread:$0]  %s198, 256, %s5, [#allocation4], 128, 128, 8
    $region33: #{tpu_custom_call.1} parent=1 // pred_fallthru
      _
    // Predicated region
    $region34: #{tpu_custom_call.1} parent=1 // pred_check
      _
    $region35: #{tpu_custom_call.1} parent=1 // pred_check_branch
      %205 = sbr.rel (0) target = $region37
    $region36: #{tpu_custom_call.1} parent=1 // pred_region
      %206 = dma.done [#allocation4], 256
    $region37: #{tpu_custom_call.1} parent=1 // pred_fallthru
      _
    %207 = vsyncpa [#allocation3], 1
    %208 = vsyncpa [#allocation6], 1
    %209 = vsyncpa [#allocation4], 1

</llo_original>
